<compile_context>
chip_gen: v5e
topology: v5e:2x2
jax: 0.10.0
libtpu: 0.0.40
codegen_flags: <defaults>
</compile_context>

<pallas_src>
import functools

import jax
import jax.numpy as jnp
from jax import lax
from jax.experimental import pallas as pl
from jax.experimental.pallas import tpu as pltpu

_LANES = 128   # TPU lane width
_CHUNK = 512   # in-kernel sub-chunk width (lanes); keeps live vregs bounded


def _pick_unroll(n):
    """Unroll factor for the inner chunk loop (always divides the trip count)."""
    if n <= 1:
        return 1
    if n <= 8:
        return n
    for u in (8, 7, 6, 5, 4, 3, 2):
        if n % u == 0:
            return u
    return 1


def _dice_partial_kernel(p_ref, t_ref, o_pt, o_p, o_t, *,
                         hw, bm, n_split, tiles_per_split, mask_needed, unroll):
    """Grid: (N, n_split, tiles_per_split); axes 0/1 parallel, axis 2 reduction.

    p_ref, t_ref : VMEM tiles (C, bm)   -- one batch element, one lane tile
    o_pt/o_p/o_t : VMEM (C, 128)        -- lane-dense running sums per (n, split)
    """
    s = pl.program_id(1)
    i = pl.program_id(2)
    C = p_ref.shape[0]
    n_full = bm // _CHUNK
    rem = bm % _CHUNK

    # Fresh accumulator slab for each (batch, split): init on its first lane tile.
    @pl.when(i == 0)
    def _():
        o_pt[...] = jnp.zeros_like(o_pt)
        o_p[...] = jnp.zeros_like(o_p)
        o_t[...] = jnp.zeros_like(o_t)

    def fold_to_lanes(x):
        """(C, w) -> (C, 128) with pure vreg-wise adds; no XLU in steady state."""
        w = x.shape[1]
        if w >= _LANES and w % _LANES == 0:
            r = x[:, 0:_LANES]
            for j in range(1, w // _LANES):
                r = r + x[:, j * _LANES:(j + 1) * _LANES]
            return r
        # ragged remainder chunk (bm not a multiple of 128): one small reduce,
        # deposited into lane 0 (happens at most once per tile).
        lane = lax.broadcasted_iota(jnp.int32, (C, _LANES), 1)
        col = jnp.sum(x, axis=1, keepdims=True)             # (C, 1)
        return jnp.where(lane == 0, col, 0.0)

    def chunk_partials(p, t, masked, n_valid):
        p = p.astype(jnp.float32)
        t = t.astype(jnp.float32)
        if masked:
            lane = lax.broadcasted_iota(jnp.int32, p.shape, 1)
            valid = lane < n_valid
            p = jnp.where(valid, p, 0.0)     # keep softmax free of OOB garbage
            t = jnp.where(valid, t, 0.0)
        # numerically-stable softmax over the class axis (== dim=1 of NCHW)
        m = jnp.max(p, axis=0, keepdims=True)
        e = jnp.exp(p - m)
        probs = e * pl.reciprocal(jnp.sum(e, axis=0, keepdims=True), approx=False)
        if masked:
            # a padded column still softmaxes to 1/C -- exclude it from all sums
            probs = jnp.where(valid, probs, 0.0)
        return fold_to_lanes(probs * t), fold_to_lanes(probs), fold_to_lanes(t)

    def tile_body(masked):
        g = s * tiles_per_split + i          # global lane-tile index
        limit = hw - g * bm                  # valid lanes in this tile (masked path)

        zero = jnp.zeros((C, _LANES), jnp.float32)
        carry = (zero, zero, zero)

        if n_full > 0:
            def body(j, acc):
                off = pl.multiple_of(j * _CHUNK, _CHUNK)
                d_pt, d_p, d_t = chunk_partials(
                    p_ref[:, pl.ds(off, _CHUNK)],
                    t_ref[:, pl.ds(off, _CHUNK)],
                    masked, limit - off)
                return (acc[0] + d_pt, acc[1] + d_p, acc[2] + d_t)
            carry = lax.fori_loop(0, n_full, body, carry, unroll=unroll)

        if rem > 0:
            off = n_full * _CHUNK
            d_pt, d_p, d_t = chunk_partials(
                p_ref[:, pl.ds(off, rem)],
                t_ref[:, pl.ds(off, rem)],
                masked, limit - off)
            carry = (carry[0] + d_pt, carry[1] + d_p, carry[2] + d_t)

        o_pt[...] += carry[0]
        o_p[...] += carry[1]
        o_t[...] += carry[2]

    if mask_needed:
        # Pay the masking cost (iota + compares + wheres) on the LAST tile only.
        is_last = jnp.logical_and(s == n_split - 1, i == tiles_per_split - 1)

        @pl.when(is_last)
        def _():
            tile_body(True)

        @pl.when(jnp.logical_not(is_last))
        def _():
            tile_body(False)
    else:
        tile_body(False)


def dice_loss(predict, target, *, smooth=1e-05):
    """predict, target: [N, C, H, W] (target one-hot / soft). Returns scalar loss."""
    assert predict.shape == target.shape, "predict & target shape do not match"
    N, C = predict.shape[:2]
    HW = 1
    for d in predict.shape[2:]:
        HW *= d

    # Zero-copy layout: NCHW is contiguous as (N, C, H*W). No HBM transpose, no cast.
    p3 = predict.reshape(N, C, HW)
    t3 = target.reshape(N, C, HW)

    # ---- lane-tile sizing from a cross-generation VMEM budget -------------------
    # bytes/lane of tile = 2 inputs x 2 pipeline buffers x 4 B x C sublanes.
    vmem_budget = 24 * 1024 * 1024            # fits v5e/v6e (128 MiB) and v7x (64 MiB)
    bytes_per_lane = 2 * 2 * 4 * C
    cap = max(_CHUNK,
              min(32768, (vmem_budget // bytes_per_lane) // _CHUNK * _CHUNK))

    if HW <= cap:
        bm = HW                               # full row: no tail, no masking
    else:
        bm = cap
        # prefer a tile that divides HW (no masked tile); never shrink more than 2x
        for cand in range(cap, cap // 2 - 1, -_CHUNK):
            if HW % cand == 0:
                bm = cand
                break

    mask_needed = (HW % bm) != 0
    num_tiles = pl.cdiv(HW, bm)

    # Keep both v7x TensorCores busy even for N == 1 / odd N: parallel split over HW.
    n_split = 2 if (num_tiles >= 2 and num_tiles % 2 == 0) else 1
    tiles_per_split = num_tiles // n_split

    unroll = _pick_unroll(bm // _CHUNK)

    in_tile_bytes = bytes_per_lane * bm
    vmem_limit = int(min(48 * 1024 * 1024, max(32 * 1024 * 1024, 3 * in_tile_bytes)))

    kernel = functools.partial(
        _dice_partial_kernel, hw=HW, bm=bm, n_split=n_split,
        tiles_per_split=tiles_per_split, mask_needed=mask_needed, unroll=unroll)

    out_shape3 = jax.ShapeDtypeStruct((N, n_split, C, _LANES), jnp.float32)
    out_spec3 = pl.BlockSpec((None, None, C, _LANES), lambda n, s, i: (n, s, 0, 0))
    in_spec = pl.BlockSpec((None, C, bm),
                           lambda n, s, i: (n, 0, s * tiles_per_split + i))

    out_pt, out_p, out_t = pl.pallas_call(
        kernel,
        out_shape=(out_shape3, out_shape3, out_shape3),
        grid_spec=pltpu.PrefetchScalarGridSpec(
            num_scalar_prefetch=0,
            grid=(N, n_split, tiles_per_split),
            in_specs=[in_spec, in_spec],
            out_specs=(out_spec3, out_spec3, out_spec3),
        ),
        compiler_params=pltpu.CompilerParams(
            dimension_semantics=("parallel", "parallel", "arbitrary"),
            vmem_limit_bytes=vmem_limit,
        ),
    )(p3, t3)

    # Tiny finalize in JAX: fold lane-dense partial sums -> global per-class dice.
    pt = jnp.sum(out_pt, axis=(0, 1, 3))   # (C,)
    ps = jnp.sum(out_p, axis=(0, 1, 3))    # (C,)
    ts = jnp.sum(out_t, axis=(0, 1, 3))    # (C,)
    per_class_loss = 1.0 - (2.0 * pt + smooth) / (ps + ts + smooth)
    return jnp.mean(per_class_loss)


def _dice_loss_ref(predict, target, smooth=1e-05):
    """Pure-JAX reference mirroring the PyTorch module (softmax normalization)."""
    N, C = predict.shape[:2]
    probs = jax.nn.softmax(predict, axis=1)
    total = 0.0
    for i in range(C):
        p = probs[:, i].reshape(N, -1)
        t = target[:, i].reshape(N, -1)
        num = jnp.sum(p * t) * 2.0 + smooth
        den = jnp.sum(p) + jnp.sum(t) + smooth
        total = total + (1.0 - num / den)
    return total / C


if __name__ == "__main__":
    key = jax.random.PRNGKey(0)
    k1, k2 = jax.random.split(key)
    N, C, H, W = 2, 4, 16, 16

    predict = jax.random.normal(k1, (N, C, H, W), dtype=jnp.float32)
    # one-hot target: argmax of random logits over the channel dim
    t_logits = jax.random.normal(k2, (N, C, H, W), dtype=jnp.float32)
    target = jax.nn.one_hot(jnp.argmax(t_logits, axis=1), C, axis=1, dtype=jnp.float32)

    loss = jax.jit(dice_loss)(predict, target)
    loss = jax.block_until_ready(loss)

    ref = _dice_loss_ref(predict, target)
    assert jnp.allclose(loss, ref, rtol=1e-5, atol=1e-5), (loss, ref)

    print("KERNEL_OK")
</pallas_src>

<mosaic_0001>
module attributes {stable_mosaic.version = 11 : i64} {
  func.func @_dice_partial_kernel(%arg0: i32, %arg1: i32, %arg2: i32, %arg3: memref<1x4x256xf32, #tpu.memory_space<vmem>>, %arg4: memref<1x4x256xf32, #tpu.memory_space<vmem>>, %arg5: memref<1x1x4x128xf32, #tpu.memory_space<vmem>>, %arg6: memref<1x1x4x128xf32, #tpu.memory_space<vmem>>, %arg7: memref<1x1x4x128xf32, #tpu.memory_space<vmem>>) attributes {dimension_semantics = [#tpu.dimension_semantics<parallel>, #tpu.dimension_semantics<parallel>, #tpu.dimension_semantics<arbitrary>], iteration_bounds = array<i64: 2, 1, 1>, scalar_prefetch = 0 : i64, scratch_operands = 0 : i64, tpu.core_type = #tpu.core_type<tc>, window_params = [{transform_indices = @transform_0, window_bounds = array<i64: 1, 4, 256>}, {transform_indices = @transform_1, window_bounds = array<i64: 1, 4, 256>}, {transform_indices = @transform_2, window_bounds = array<i64: 1, 1, 4, 128>}, {transform_indices = @transform_3, window_bounds = array<i64: 1, 1, 4, 128>}, {transform_indices = @transform_4, window_bounds = array<i64: 1, 1, 4, 128>}]} {
    %c0_i32 = arith.constant 0 : i32
    %0 = arith.cmpi eq, %arg2, %c0_i32 : i32
    %1 = arith.extui %0 : i1 to i32
    %c0_i32_0 = arith.constant 0 : i32
    %2 = arith.cmpi ne, %1, %c0_i32_0 : i32
    scf.if %2 {
      %cst_32 = arith.constant 0.000000e+00 : f32
      %49 = vector.broadcast %cst_32 : f32 to vector<4x128xf32>
      %c0_33 = arith.constant 0 : index
      %c0_34 = arith.constant 0 : index
      %c0_35 = arith.constant 0 : index
      %c0_36 = arith.constant 0 : index
      %50 = vector.load %arg5[%c0_33, %c0_34, %c0_35, %c0_36] : memref<1x1x4x128xf32, #tpu.memory_space<vmem>>, vector<1x1x4x128xf32>
      %51 = vector.shape_cast %50 : vector<1x1x4x128xf32> to vector<4x128xf32>
      %52 = vector.shape_cast %49 : vector<4x128xf32> to vector<1x1x4x128xf32>
      tpu.vector_store %arg5[%c0_33, %c0_34, %c0_35, %c0_36], %52 {strides = array<i32>} : memref<1x1x4x128xf32, #tpu.memory_space<vmem>>, vector<1x1x4x128xf32>,
      %cst_37 = arith.constant 0.000000e+00 : f32
      %53 = vector.broadcast %cst_37 : f32 to vector<4x128xf32>
      %c0_38 = arith.constant 0 : index
      %c0_39 = arith.constant 0 : index
      %c0_40 = arith.constant 0 : index
      %c0_41 = arith.constant 0 : index
      %54 = vector.load %arg6[%c0_38, %c0_39, %c0_40, %c0_41] : memref<1x1x4x128xf32, #tpu.memory_space<vmem>>, vector<1x1x4x128xf32>
      %55 = vector.shape_cast %54 : vector<1x1x4x128xf32> to vector<4x128xf32>
      %56 = vector.shape_cast %53 : vector<4x128xf32> to vector<1x1x4x128xf32>
      tpu.vector_store %arg6[%c0_38, %c0_39, %c0_40, %c0_41], %56 {strides = array<i32>} : memref<1x1x4x128xf32, #tpu.memory_space<vmem>>, vector<1x1x4x128xf32>,
      %cst_42 = arith.constant 0.000000e+00 : f32
      %57 = vector.broadcast %cst_42 : f32 to vector<4x128xf32>
      %c0_43 = arith.constant 0 : index
      %c0_44 = arith.constant 0 : index
      %c0_45 = arith.constant 0 : index
      %c0_46 = arith.constant 0 : index
      %58 = vector.load %arg7[%c0_43, %c0_44, %c0_45, %c0_46] : memref<1x1x4x128xf32, #tpu.memory_space<vmem>>, vector<1x1x4x128xf32>
      %59 = vector.shape_cast %58 : vector<1x1x4x128xf32> to vector<4x128xf32>
      %60 = vector.shape_cast %57 : vector<4x128xf32> to vector<1x1x4x128xf32>
      tpu.vector_store %arg7[%c0_43, %c0_44, %c0_45, %c0_46], %60 {strides = array<i32>} : memref<1x1x4x128xf32, #tpu.memory_space<vmem>>, vector<1x1x4x128xf32>,
    } else {
    }
    %cst = arith.constant 0.000000e+00 : f32
    %3 = vector.broadcast %cst : f32 to vector<4x128xf32>
    %c0 = arith.constant 0 : index
    %c0_1 = arith.constant 0 : index
    %c0_2 = arith.constant 0 : index
    %4 = vector.load %arg3[%c0, %c0_1, %c0_2] : memref<1x4x256xf32, #tpu.memory_space<vmem>>, vector<1x4x256xf32>
    %5 = vector.shape_cast %4 : vector<1x4x256xf32> to vector<4x256xf32>
    %c0_3 = arith.constant 0 : index
    %c0_4 = arith.constant 0 : index
    %c0_5 = arith.constant 0 : index
    %6 = vector.load %arg4[%c0_3, %c0_4, %c0_5] : memref<1x4x256xf32, #tpu.memory_space<vmem>>, vector<1x4x256xf32>
    %7 = vector.shape_cast %6 : vector<1x4x256xf32> to vector<4x256xf32>
    %cst_6 = arith.constant dense<0xFF800000> : vector<256xf32>
    %8 = vector.multi_reduction <maximumf>, %5, %cst_6 [0] : vector<4x256xf32> to vector<256xf32>
    %9 = vector.shape_cast %8 : vector<256xf32> to vector<1x256xf32>
    %10 = vector.broadcast %9 : vector<1x256xf32> to vector<4x256xf32>
    %11 = arith.subf %5, %10 : vector<4x256xf32>
    %12 = math.exp %11 : vector<4x256xf32>
    %cst_7 = arith.constant dense<0.000000e+00> : vector<256xf32>
    %13 = vector.multi_reduction <add>, %12, %cst_7 [0] : vector<4x256xf32> to vector<256xf32>
    %14 = vector.shape_cast %13 : vector<256xf32> to vector<1x256xf32>
    %15 = tpu.reciprocal %14 : vector<1x256xf32> -> vector<1x256xf32>
    %16 = vector.broadcast %15 : vector<1x256xf32> to vector<4x256xf32>
    %17 = arith.mulf %12, %16 : vector<4x256xf32>
    %18 = arith.mulf %17, %7 : vector<4x256xf32>
    %19 = vector.extract_strided_slice %18 {offsets = [0, 0], sizes = [4, 128], strides = [1, 1]} : vector<4x256xf32> to vector<4x128xf32>
    %20 = vector.extract_strided_slice %18 {offsets = [0, 128], sizes = [4, 128], strides = [1, 1]} : vector<4x256xf32> to vector<4x128xf32>
    %21 = arith.addf %19, %20 : vector<4x128xf32>
    %22 = vector.extract_strided_slice %17 {offsets = [0, 0], sizes = [4, 128], strides = [1, 1]} : vector<4x256xf32> to vector<4x128xf32>
    %23 = vector.extract_strided_slice %17 {offsets = [0, 128], sizes = [4, 128], strides = [1, 1]} : vector<4x256xf32> to vector<4x128xf32>
    %24 = arith.addf %22, %23 : vector<4x128xf32>
    %25 = vector.extract_strided_slice %7 {offsets = [0, 0], sizes = [4, 128], strides = [1, 1]} : vector<4x256xf32> to vector<4x128xf32>
    %26 = vector.extract_strided_slice %7 {offsets = [0, 128], sizes = [4, 128], strides = [1, 1]} : vector<4x256xf32> to vector<4x128xf32>
    %27 = arith.addf %25, %26 : vector<4x128xf32>
    %28 = arith.addf %3, %21 : vector<4x128xf32>
    %29 = arith.addf %3, %24 : vector<4x128xf32>
    %30 = arith.addf %3, %27 : vector<4x128xf32>
    %c0_8 = arith.constant 0 : index
    %c0_9 = arith.constant 0 : index
    %c0_10 = arith.constant 0 : index
    %c0_11 = arith.constant 0 : index
    %31 = vector.load %arg5[%c0_8, %c0_9, %c0_10, %c0_11] : memref<1x1x4x128xf32, #tpu.memory_space<vmem>>, vector<1x1x4x128xf32>
    %32 = vector.shape_cast %31 : vector<1x1x4x128xf32> to vector<4x128xf32>
    %33 = arith.addf %32, %28 : vector<4x128xf32>
    %c0_12 = arith.constant 0 : index
    %c0_13 = arith.constant 0 : index
    %c0_14 = arith.constant 0 : index
    %c0_15 = arith.constant 0 : index
    %34 = vector.load %arg5[%c0_12, %c0_13, %c0_14, %c0_15] : memref<1x1x4x128xf32, #tpu.memory_space<vmem>>, vector<1x1x4x128xf32>
    %35 = vector.shape_cast %34 : vector<1x1x4x128xf32> to vector<4x128xf32>
    %36 = vector.shape_cast %33 : vector<4x128xf32> to vector<1x1x4x128xf32>
    tpu.vector_store %arg5[%c0_12, %c0_13, %c0_14, %c0_15], %36 {strides = array<i32>} : memref<1x1x4x128xf32, #tpu.memory_space<vmem>>, vector<1x1x4x128xf32>,
    %c0_16 = arith.constant 0 : index
    %c0_17 = arith.constant 0 : index
    %c0_18 = arith.constant 0 : index
    %c0_19 = arith.constant 0 : index
    %37 = vector.load %arg6[%c0_16, %c0_17, %c0_18, %c0_19] : memref<1x1x4x128xf32, #tpu.memory_space<vmem>>, vector<1x1x4x128xf32>
    %38 = vector.shape_cast %37 : vector<1x1x4x128xf32> to vector<4x128xf32>
    %39 = arith.addf %38, %29 : vector<4x128xf32>
    %c0_20 = arith.constant 0 : index
    %c0_21 = arith.constant 0 : index
    %c0_22 = arith.constant 0 : index
    %c0_23 = arith.constant 0 : index
    %40 = vector.load %arg6[%c0_20, %c0_21, %c0_22, %c0_23] : memref<1x1x4x128xf32, #tpu.memory_space<vmem>>, vector<1x1x4x128xf32>
    %41 = vector.shape_cast %40 : vector<1x1x4x128xf32> to vector<4x128xf32>
    %42 = vector.shape_cast %39 : vector<4x128xf32> to vector<1x1x4x128xf32>
    tpu.vector_store %arg6[%c0_20, %c0_21, %c0_22, %c0_23], %42 {strides = array<i32>} : memref<1x1x4x128xf32, #tpu.memory_space<vmem>>, vector<1x1x4x128xf32>,
    %c0_24 = arith.constant 0 : index
    %c0_25 = arith.constant 0 : index
    %c0_26 = arith.constant 0 : index
    %c0_27 = arith.constant 0 : index
    %43 = vector.load %arg7[%c0_24, %c0_25, %c0_26, %c0_27] : memref<1x1x4x128xf32, #tpu.memory_space<vmem>>, vector<1x1x4x128xf32>
    %44 = vector.shape_cast %43 : vector<1x1x4x128xf32> to vector<4x128xf32>
    %45 = arith.addf %44, %30 : vector<4x128xf32>
    %c0_28 = arith.constant 0 : index
    %c0_29 = arith.constant 0 : index
    %c0_30 = arith.constant 0 : index
    %c0_31 = arith.constant 0 : index
    %46 = vector.load %arg7[%c0_28, %c0_29, %c0_30, %c0_31] : memref<1x1x4x128xf32, #tpu.memory_space<vmem>>, vector<1x1x4x128xf32>
    %47 = vector.shape_cast %46 : vector<1x1x4x128xf32> to vector<4x128xf32>
    %48 = vector.shape_cast %45 : vector<4x128xf32> to vector<1x1x4x128xf32>
    tpu.vector_store %arg7[%c0_28, %c0_29, %c0_30, %c0_31], %48 {strides = array<i32>} : memref<1x1x4x128xf32, #tpu.memory_space<vmem>>, vector<1x1x4x128xf32>,
    return
  }
  func.func @transform_0(%arg0: i32, %arg1: i32, %arg2: i32) -> (i32, i32, i32) {
    %c1_i32 = arith.constant 1 : i32
    %0 = arith.muli %arg1, %c1_i32 : i32
    %1 = arith.addi %0, %arg2 : i32
    %c0_i32 = arith.constant 0 : i32
    %c0_i32_0 = arith.constant 0 : i32
    return %arg0, %c0_i32, %1 : i32, i32, i32
  }
  func.func @transform_1(%arg0: i32, %arg1: i32, %arg2: i32) -> (i32, i32, i32) {
    %c1_i32 = arith.constant 1 : i32
    %0 = arith.muli %arg1, %c1_i32 : i32
    %1 = arith.addi %0, %arg2 : i32
    %c0_i32 = arith.constant 0 : i32
    %c0_i32_0 = arith.constant 0 : i32
    return %arg0, %c0_i32, %1 : i32, i32, i32
  }
  func.func @transform_2(%arg0: i32, %arg1: i32, %arg2: i32) -> (i32, i32, i32, i32) {
    %c0_i32 = arith.constant 0 : i32
    %c0_i32_0 = arith.constant 0 : i32
    %c0_i32_1 = arith.constant 0 : i32
    return %arg0, %arg1, %c0_i32, %c0_i32_0 : i32, i32, i32, i32
  }
  func.func @transform_3(%arg0: i32, %arg1: i32, %arg2: i32) -> (i32, i32, i32, i32) {
    %c0_i32 = arith.constant 0 : i32
    %c0_i32_0 = arith.constant 0 : i32
    %c0_i32_1 = arith.constant 0 : i32
    return %arg0, %arg1, %c0_i32, %c0_i32_0 : i32, i32, i32, i32
  }
  func.func @transform_4(%arg0: i32, %arg1: i32, %arg2: i32) -> (i32, i32, i32, i32) {
    %c0_i32 = arith.constant 0 : i32
    %c0_i32_0 = arith.constant 0 : i32
    %c0_i32_1 = arith.constant 0 : i32
    return %arg0, %arg1, %c0_i32, %c0_i32_0 : i32, i32, i32, i32
  }
}

</mosaic_0001>

<llo_original>
// kernel: dice_loss.1
$region0: #{dice_loss.1}
  #allocation0 [shape = 'u32[]', space=smem, size = 0x4, offset = 0x4, fixed_abs, tag = 'smem constant byte address 0x4 - core index']
  #allocation1 [shape = 'u32[72,128]{1,0:T(1,128)}', space=vmem, size = 0x9000, scoped, tag = 'internal scratch']
  %s0 = inlined_call_operand.vmem [shape: f32[2,4,256], index: 0, kind: input, shape index: {}]
  %s1 = inlined_call_operand.vmem [shape: f32[2,4,256], index: 1, kind: input, shape index: {}]
  %s2 = inlined_call_operand.vmem [shape: f32[2,1,4,128], index: 2, kind: output, shape index: {0}]
  %s3 = inlined_call_operand.vmem [shape: f32[2,1,4,128], index: 3, kind: output, shape index: {1}]
  %s4 = inlined_call_operand.vmem [shape: f32[2,1,4,128], index: 4, kind: output, shape index: {2}]
  %5 = xla_tuple %s2, %s3, %s4
  %s6 = sld [smem:[#allocation0]]
  $region61: #{dice_loss.1} parent=0
    _
  %s8 = ssub.s32 1, %s6
  %s9 = scalar_select 0, %s8, %s6
  loop: start=0, step=1, limit=4
  $region2: #{dice_loss.1} parent=0 // loop_pre_header
    _
  $region3: #{dice_loss.1} parent=0 // loop_header
    %s11 = sphi 0, %s15
    %p12 = scmp.ge.s32.totalorder %s11, 4
    %s18 = sphi 0, %s37
    %s19 = sphi 0, %s33
    %s20 = sphi 0, %s29
    %s21 = sphi 0, %s18
    %s22 = sphi 0, %s19
    %s23 = sphi 0, %s20
    %s24 = sphi 0, %s21
    %s25 = sphi 0, %s22
    %s26 = sphi 0, %s23
    %s44 = sphi 0, %s46
    %s47 = sphi 0, %s44
    %s48 = sphi 0, %s47
    %s64 = sphi 0, %s48
    %s74 = sphi 0, %s76
    %s77 = sphi 0, %s74
    %s78 = sphi 0, %s77
    %s94 = sphi 0, %s78
    %s102 = sphi 0, %s104
    %s105 = sphi 0, %s102
    %s106 = sphi 0, %s105
    %s122 = sphi 0, %s106
    %s130 = sphi 0, %s132
    %s133 = sphi 0, %s130
    %s134 = sphi 0, %s133
    %s150 = sphi 0, %s134
    %s158 = sphi 0, %s160
    %s161 = sphi 0, %s158
    %s162 = sphi 0, %s161
    %s178 = sphi 0, %s162
  $region4: #{dice_loss.1} parent=0 // loop_header_branch
    %14 = sbr.rel (%p12) target = $region8
  $region5: #{dice_loss.1} parent=0 // loop_body
    %s16 = ssub.s32 %s11, 1
    %s17 = ssub.s32 %s11, 2
    %s27 = sadd.s32 1, %s20
    %p28 = scmp.ge.s32.totalorder %s27, 1
    %s29 = scalar_select %p28, 0, %s27
    %s30 = sadd.s32 1, %s19
    %s31 = scalar_select %p28, %s30, %s19
    %p32 = scmp.ge.s32.totalorder %s31, 1
    %s33 = scalar_select %p32, 0, %s31
    %s34 = sadd.s32 1, %s18
    %s35 = scalar_select %p32, %s34, %s18
    %p36 = scmp.ge.s32.totalorder %s35, 2
    %s37 = scalar_select %p36, 0, %s35
    %s38 = sadd.s32 %s19, %s20
    %s39 = sadd.s32 %s33, %s29
    %s40 = ssub.s32 %s18, %s37
    %s41 = ssub.s32 %s38, %s39
    %s42 = sor.u32 %s40, %s41
    %p43 = scmp.eq.s32.totalorder %s42, 0
    %s45 = sadd.s32 %s44, 1
    %s46 = scalar_select %p43, %s44, %s45
    %p49 = pneg %p43
    %p50 = scmp.eq.s32.totalorder %s11, 1
    %p51 = por %p49, %p50
    %p52 = scmp.ne.s32.totalorder %s44, %s47
    %p53 = scmp.eq.s32.totalorder %s11, 0
    %p54 = por %p52, %p53
    %p55 = scmp.ne.s32.totalorder %s44, %s47
    %p56 = scmp.eq.s32.totalorder %s16, 1
    %p57 = por %p55, %p56
    %p58 = scmp.ne.s32.totalorder %s47, %s48
    %p59 = scmp.eq.s32.totalorder %s16, 0
    %p60 = por %p58, %p59
    %p61 = scmp.ne.s32.totalorder %s47, %s48
    %p62 = scmp.eq.s32.totalorder %s17, 1
    %p63 = por %p61, %p62
    %p65 = scmp.ne.s32.totalorder %s48, %s64
    %p66 = scmp.eq.s32.totalorder %s17, 0
    %p67 = por %p65, %p66
    %s68 = sadd.s32 %s19, %s20
    %s69 = sadd.s32 %s33, %s29
    %s70 = ssub.s32 %s18, %s37
    %s71 = ssub.s32 %s68, %s69
    %s72 = sor.u32 %s70, %s71
    %p73 = scmp.eq.s32.totalorder %s72, 0
    %s75 = sadd.s32 %s74, 1
    %s76 = scalar_select %p73, %s74, %s75
    %p79 = pneg %p73
    %p80 = scmp.eq.s32.totalorder %s11, 1
    %p81 = por %p79, %p80
    %p82 = scmp.ne.s32.totalorder %s74, %s77
    %p83 = scmp.eq.s32.totalorder %s11, 0
    %p84 = por %p82, %p83
    %p85 = scmp.ne.s32.totalorder %s74, %s77
    %p86 = scmp.eq.s32.totalorder %s16, 1
    %p87 = por %p85, %p86
    %p88 = scmp.ne.s32.totalorder %s77, %s78
    %p89 = scmp.eq.s32.totalorder %s16, 0
    %p90 = por %p88, %p89
    %p91 = scmp.ne.s32.totalorder %s77, %s78
    %p92 = scmp.eq.s32.totalorder %s17, 1
    %p93 = por %p91, %p92
    %p95 = scmp.ne.s32.totalorder %s78, %s94
    %p96 = scmp.eq.s32.totalorder %s17, 0
    %p97 = por %p95, %p96
    %s98 = ssub.s32 %s18, %s37
    %s99 = ssub.s32 %s19, %s33
    %s100 = sor.u32 %s98, %s99
    %p101 = scmp.eq.s32.totalorder %s100, 0
    %s103 = sadd.s32 %s102, 1
    %s104 = scalar_select %p101, %s102, %s103
    %p107 = pneg %p101
    %p108 = scmp.eq.s32.totalorder %s11, 1
    %p109 = por %p107, %p108
    %p110 = scmp.ne.s32.totalorder %s102, %s105
    %p111 = scmp.eq.s32.totalorder %s11, 0
    %p112 = por %p110, %p111
    %p113 = scmp.ne.s32.totalorder %s102, %s105
    %p114 = scmp.eq.s32.totalorder %s16, 1
    %p115 = por %p113, %p114
    %p116 = scmp.ne.s32.totalorder %s105, %s106
    %p117 = scmp.eq.s32.totalorder %s16, 0
    %p118 = por %p116, %p117
    %p119 = scmp.ne.s32.totalorder %s105, %s106
    %p120 = scmp.eq.s32.totalorder %s17, 1
    %p121 = por %p119, %p120
    %p123 = scmp.ne.s32.totalorder %s106, %s122
    %p124 = scmp.eq.s32.totalorder %s17, 0
    %p125 = por %p123, %p124
    %s126 = ssub.s32 %s18, %s37
    %s127 = ssub.s32 %s19, %s33
    %s128 = sor.u32 %s126, %s127
    %p129 = scmp.eq.s32.totalorder %s128, 0
    %s131 = sadd.s32 %s130, 1
    %s132 = scalar_select %p129, %s130, %s131
    %p135 = pneg %p129
    %p136 = scmp.eq.s32.totalorder %s11, 1
    %p137 = por %p135, %p136
    %p138 = scmp.ne.s32.totalorder %s130, %s133
    %p139 = scmp.eq.s32.totalorder %s11, 0
    %p140 = por %p138, %p139
    %p141 = scmp.ne.s32.totalorder %s130, %s133
    %p142 = scmp.eq.s32.totalorder %s16, 1
    %p143 = por %p141, %p142
    %p144 = scmp.ne.s32.totalorder %s133, %s134
    %p145 = scmp.eq.s32.totalorder %s16, 0
    %p146 = por %p144, %p145
    %p147 = scmp.ne.s32.totalorder %s133, %s134
    %p148 = scmp.eq.s32.totalorder %s17, 1
    %p149 = por %p147, %p148
    %p151 = scmp.ne.s32.totalorder %s134, %s150
    %p152 = scmp.eq.s32.totalorder %s17, 0
    %p153 = por %p151, %p152
    %s154 = ssub.s32 %s18, %s37
    %s155 = ssub.s32 %s19, %s33
    %s156 = sor.u32 %s154, %s155
    %p157 = scmp.eq.s32.totalorder %s156, 0
    %s159 = sadd.s32 %s158, 1
    %s160 = scalar_select %p157, %s158, %s159
    %p163 = pneg %p157
    %p164 = scmp.eq.s32.totalorder %s11, 1
    %p165 = por %p163, %p164
    %p166 = scmp.ne.s32.totalorder %s158, %s161
    %p167 = scmp.eq.s32.totalorder %s11, 0
    %p168 = por %p166, %p167
    %p169 = scmp.ne.s32.totalorder %s158, %s161
    %p170 = scmp.eq.s32.totalorder %s16, 1
    %p171 = por %p169, %p170
    %p172 = scmp.ne.s32.totalorder %s161, %s162
    %p173 = scmp.eq.s32.totalorder %s16, 0
    %p174 = por %p172, %p173
    %p175 = scmp.ne.s32.totalorder %s161, %s162
    %p176 = scmp.eq.s32.totalorder %s17, 1
    %p177 = por %p175, %p176
    %p179 = scmp.ne.s32.totalorder %s162, %s178
    %p180 = scmp.eq.s32.totalorder %s17, 0
    %p181 = por %p179, %p180
    %p182 = scmp.le.s32.totalorder 1, %s11
    %p183 = scmp.lt.s32.totalorder %s11, 3
    %p184 = pnand %p182, %p183
    %p185 = pneg %p184
    // Predicated region
    $region9: #{dice_loss.1} parent=5 // pred_check
      _
    $region10: #{dice_loss.1} parent=5 // pred_check_branch
      %187 = sbr.rel (%p184) target = $region12
    $region11: #{dice_loss.1} parent=5 // pred_region
      %s188 = ssub.s32 %s11, 1
    $region12: #{dice_loss.1} parent=5 // pred_fallthru
      _
    %p189 = scmp.lt.s32.totalorder %s11, 2
    // Predicated region
    $region13: #{dice_loss.1} parent=5 // pred_check
      %p190 = pneg %p189
    $region14: #{dice_loss.1} parent=5 // pred_check_branch
      %192 = sbr.rel (%p190) target = $region16
    $region15: #{dice_loss.1} parent=5 // pred_region
      // Predicated region
      $region17: #{dice_loss.1} parent=15 // pred_check
        %p193 = pneg %p54
      $region18: #{dice_loss.1} parent=15 // pred_check_branch
        %195 = sbr.rel (%p193) target = $region20
      $region19: #{dice_loss.1} parent=15 // pred_region
        %s196 = sadd.s32 %s19, %s20
        %s197 = smul.u32 2, %s196
        %p198 = scmp.lt.s32.totalorder %s18, 1
        %s199 = scalar_select %p198, %s18, 1
        %p200 = scmp.lt.s32.totalorder %s197, 1
        %s201 = scalar_select %p200, %s197, 1
        %s202 = smul.addr %s199, 2
        %s203 = sadd.s32 %s201, %s202
        %s204 = smul.addr %s203, 4
        %s205 = scalar_lea.vmem %s0, %s204
        %s206 = sadd.s32 %s19, %s20
        %s207 = smul.u32 2, %s206
      $region20: #{dice_loss.1} parent=15 // pred_fallthru
        _
      // Predicated region
      $region21: #{dice_loss.1} parent=15 // pred_check
        %p208 = pneg %p84
      $region22: #{dice_loss.1} parent=15 // pred_check_branch
        %210 = sbr.rel (%p208) target = $region24
      $region23: #{dice_loss.1} parent=15 // pred_region
        %s211 = sadd.s32 %s19, %s20
        %s212 = smul.u32 2, %s211
        %p213 = scmp.lt.s32.totalorder %s18, 1
        %s214 = scalar_select %p213, %s18, 1
        %p215 = scmp.lt.s32.totalorder %s212, 1
        %s216 = scalar_select %p215, %s212, 1
        %s217 = smul.addr %s214, 2
        %s218 = sadd.s32 %s216, %s217
        %s219 = smul.addr %s218, 4
        %s220 = scalar_lea.vmem %s1, %s219
        %s221 = sadd.s32 %s19, %s20
        %s222 = smul.u32 2, %s221
      $region24: #{dice_loss.1} parent=15 // pred_fallthru
        _
    $region16: #{dice_loss.1} parent=5 // pred_fallthru
      _
    %p223 = scmp.le.s32.totalorder 1, %s11
    %p224 = scmp.lt.s32.totalorder %s11, 3
    %p225 = pnand %p223, %p224
    %p226 = pneg %p225
    // Predicated region
    $region25: #{dice_loss.1} parent=5 // pred_check
      _
    $region26: #{dice_loss.1} parent=5 // pred_check_branch
      %228 = sbr.rel (%p225) target = $region28
    $region27: #{dice_loss.1} parent=5 // pred_region
      %s229 = ssub.s32 %s11, 1
      %s230 = sadd.s32 %s22, %s23
      %s231 = smul.u32 2, %s230
      %p232 = scmp.lt.s32.totalorder %s21, 1
      %s233 = scalar_select %p232, %s21, 1
      %p234 = scmp.lt.s32.totalorder %s231, 1
      %s235 = scalar_select %p234, %s231, 1
      %s236 = smul.addr %s233, 2
      %s237 = sadd.s32 %s235, %s236
      %s238 = smul.addr %s237, 4
      %s239 = scalar_lea.vmem %s0, %s238
      %p240 = pneg %p60
      %p241 = pneg %p57
      %s242 = sadd.s32 %s22, %s23
      %s243 = smul.u32 2, %s242
      %p244 = scmp.lt.s32.totalorder %s21, 1
      %s245 = scalar_select %p244, %s21, 1
      %p246 = scmp.lt.s32.totalorder %s243, 1
      %s247 = scalar_select %p246, %s243, 1
      %s248 = smul.addr %s245, 2
      %s249 = sadd.s32 %s247, %s248
      %s250 = smul.addr %s249, 4
      %s251 = scalar_lea.vmem %s1, %s250
      %p252 = pneg %p90
      %p253 = pneg %p87
      %p254 = pneg %p118
      %p255 = pneg %p115
      %p256 = scmp.lt.s32.totalorder %s21, 1
      %s257 = scalar_select %p256, %s21, 1
      %p258 = scmp.lt.s32.totalorder %s22, 0
      %s259 = scalar_select %p258, %s22, 0
      %s260 = sadd.s32 %s259, %s257
      %s261 = smul.addr %s260, 4
      %s262 = scalar_lea.vmem %s2, %s261
      %p263 = pneg %p146
      %p264 = pneg %p143
      %p265 = scmp.lt.s32.totalorder %s21, 1
      %s266 = scalar_select %p265, %s21, 1
      %p267 = scmp.lt.s32.totalorder %s22, 0
      %s268 = scalar_select %p267, %s22, 0
      %s269 = sadd.s32 %s268, %s266
      %s270 = smul.addr %s269, 4
      %s271 = scalar_lea.vmem %s3, %s270
      %p272 = pneg %p174
      %p273 = pneg %p171
      %p274 = scmp.lt.s32.totalorder %s21, 1
      %s275 = scalar_select %p274, %s21, 1
      %p276 = scmp.lt.s32.totalorder %s22, 0
      %s277 = scalar_select %p276, %s22, 0
      %s278 = sadd.s32 %s277, %s275
      %s279 = smul.addr %s278, 4
      %s280 = scalar_lea.vmem %s4, %s279
      %s281 = sadd.s32 %s22, %s23
      %s282 = smul.u32 2, %s281
      %p283 = scmp.lt.s32.totalorder %s21, 1
      %s284 = scalar_select %p283, %s21, 1
      %p285 = scmp.lt.s32.totalorder %s282, 1
      %s286 = scalar_select %p285, %s282, 1
      %s287 = smul.addr %s284, 2
      %s288 = sadd.s32 %s286, %s287
      %s289 = smul.addr %s288, 4
      %s290 = scalar_lea.vmem %s0, %s289
      %s291 = sadd.s32 %s22, %s23
      %s292 = smul.u32 2, %s291
      %s293 = sadd.s32 %s22, %s23
      %s294 = smul.u32 2, %s293
      %p295 = scmp.lt.s32.totalorder %s21, 1
      %s296 = scalar_select %p295, %s21, 1
      %p297 = scmp.lt.s32.totalorder %s294, 1
      %s298 = scalar_select %p297, %s294, 1
      %s299 = smul.addr %s296, 2
      %s300 = sadd.s32 %s298, %s299
      %s301 = smul.addr %s300, 4
      %s302 = scalar_lea.vmem %s1, %s301
      %s303 = sadd.s32 %s22, %s23
      %s304 = smul.u32 2, %s303
      %p305 = scmp.lt.s32.totalorder %s21, 1
      %s306 = scalar_select %p305, %s21, 1
      %p307 = scmp.lt.s32.totalorder %s22, 0
      %s308 = scalar_select %p307, %s22, 0
      %s309 = sadd.s32 %s308, %s306
      %s310 = smul.addr %s309, 4
      %s311 = scalar_lea.vmem %s2, %s310
      %p312 = scmp.lt.s32.totalorder %s21, 1
      %s313 = scalar_select %p312, %s21, 1
      %p314 = scmp.lt.s32.totalorder %s22, 0
      %s315 = scalar_select %p314, %s22, 0
      %s316 = sadd.s32 %s315, %s313
      %s317 = smul.addr %s316, 4
      %s318 = scalar_lea.vmem %s3, %s317
      %p319 = scmp.lt.s32.totalorder %s21, 1
      %s320 = scalar_select %p319, %s21, 1
      %p321 = scmp.lt.s32.totalorder %s22, 0
      %s322 = scalar_select %p321, %s22, 0
      %s323 = sadd.s32 %s322, %s320
      %s324 = smul.addr %s323, 4
      %s325 = scalar_lea.vmem %s4, %s324
      %p326 = scmp.eq.s32.totalorder %s23, 0
      // Predicated region
      $region29: #{dice_loss.1} parent=27 // pred_check
        %p327 = pneg %p326
      $region30: #{dice_loss.1} parent=27 // pred_check_branch
        %329 = sbr.rel (%p327) target = $region32
      $region31: #{dice_loss.1} parent=27 // pred_region
        %330 = vst [vmem:[%s311] sm:$0xf] 0.0
        %331 = vst [vmem:[%s318] sm:$0xf] 0.0
        %332 = vst [vmem:[%s325] sm:$0xf] 0.0
      $region32: #{dice_loss.1} parent=27 // pred_fallthru
        _
      %v333 = vld [vmem:[%s290] sm:$0xff]
      %v334 = vld [vmem:[%s302] sm:$0xff]
      %336 = vst [vmem:[#allocation1] ss:$2 sm:$0xff] %v333
      %v337 = vld.sshfl [vmem:[#allocation1] sm:$0xff pattern:$0x75316420]
      %v338 = vld.sshfl [vmem:[#allocation1 + $0x8] sm:$0xff pattern:$0x75316420]
      %vm341 = vcmask 1043456
      %v342 = vsel %vm341, %v337, -inf
      %v343 = vrot.slane %v342, 4
      %v344 = vmax.f32 %v342, %v343
      %v345 = vrot.slane %v344, 2
      %v346 = vmax.f32 %v344, %v345
      %v347 = vrot.slane %v346, 1
      %v348 = vmax.f32 %v346, %v347
      %v349 = vsel %vm341, %v338, -inf
      %v350 = vrot.slane %v349, 4
      %v351 = vmax.f32 %v349, %v350
      %v352 = vrot.slane %v351, 2
      %v353 = vmax.f32 %v351, %v352
      %v354 = vrot.slane %v353, 1
      %v355 = vmax.f32 %v353, %v354
      %v358 = vrot.slane %v355, 4
      %v359 = vsel %vm341, %v348, %v358
      %v361 = vsub.f32 %v333, %v359
      %v362 = vmul.f32 %v361, 1.442695
      %v363 = vpow.pop %v362
      %365 = vst [vmem:[#allocation1] ss:$2 sm:$0xff] %v363
      %v366 = vld.sshfl [vmem:[#allocation1] sm:$0xff pattern:$0x75316420]
      %v367 = vld.sshfl [vmem:[#allocation1 + $0x8] sm:$0xff pattern:$0x75316420]
      %v370 = vsel %vm341, %v366, 0.0
      %v371 = vrot.slane %v370, 4
      %v372 = vadd.f32 %v370, %v371
      %v373 = vrot.slane %v372, 2
      %v374 = vadd.f32 %v372, %v373
      %v375 = vrot.slane %v374, 1
      %v376 = vadd.f32 %v374, %v375
      %v377 = vsel %vm341, %v367, 0.0
      %v378 = vrot.slane %v377, 4
      %v379 = vadd.f32 %v377, %v378
      %v380 = vrot.slane %v379, 2
      %v381 = vadd.f32 %v379, %v380
      %v382 = vrot.slane %v381, 1
      %v383 = vadd.f32 %v381, %v382
      %v384 = vrcp.pop %v376
      %v385 = vmul.f32 %v376, %v384
      %v386 = vsub.f32 1.0, %v385
      %v387 = vmul.f32 %v384, %v386
      %v388 = vadd.f32 %v384, %v387
      %vm389 = vweird.f32 %v376
      %vm390 = vweird.f32 %v384
      %vm391 = vmor %vm389, %vm390
      %v392 = vsel %vm391, %v384, %v388
      %v393 = vand.u32 2147483647, %v376
      %vm394 = vcmp.eq.f32.partialorder %v393, 8.507059e+37
      %v395 = vand.u32 %v376, 2147483648
      %v396 = vor.u32 1.1754944e-38, %v395
      %v397 = vsel %vm394, %v396, %v392
      %v398 = vrcp.pop %v383
      %v399 = vmul.f32 %v383, %v398
      %v400 = vsub.f32 1.0, %v399
      %v401 = vmul.f32 %v398, %v400
      %v402 = vadd.f32 %v398, %v401
      %vm403 = vweird.f32 %v383
      %vm404 = vweird.f32 %v398
      %vm405 = vmor %vm403, %vm404
      %v406 = vsel %vm405, %v398, %v402
      %v407 = vand.u32 2147483647, %v383
      %vm408 = vcmp.eq.f32.partialorder %v407, 8.507059e+37
      %v409 = vand.u32 %v383, 2147483648
      %v410 = vor.u32 1.1754944e-38, %v409
      %v411 = vsel %vm408, %v410, %v406
      %v414 = vrot.slane %v411, 4
      %v415 = vsel %vm341, %v397, %v414
      %v417 = vmul.f32 %v363, %v415
      %v418 = vmul.f32 %v417, %v334
      %v420 = vrot.slane %v418, 4
      %v422 = vadd.f32 %v418, %v420
      %v424 = vrot.slane %v417, 4
      %v426 = vadd.f32 %v417, %v424
      %v428 = vrot.slane %v334, 4
      %v430 = vadd.f32 %v334, %v428
      %v431 = vadd.f32 %v422, 0.0
      %v432 = vadd.f32 %v426, 0.0
      %v433 = vadd.f32 %v430, 0.0
      %v434 = vld [vmem:[%s311] sm:$0xf]
      %v435 = vadd.f32 %v434, %v431
      %436 = vst [vmem:[%s311] sm:$0xf] %v435
      %v437 = vld [vmem:[%s318] sm:$0xf]
      %v438 = vadd.f32 %v437, %v432
      %439 = vst [vmem:[%s318] sm:$0xf] %v438
      %v440 = vld [vmem:[%s325] sm:$0xf]
      %v441 = vadd.f32 %v440, %v433
      %442 = vst [vmem:[%s325] sm:$0xf] %v441
      %p443 = scmp.lt.s32.totalorder %s21, 1
      %s444 = scalar_select %p443, %s21, 1
      %p445 = scmp.lt.s32.totalorder %s22, 0
      %s446 = scalar_select %p445, %s22, 0
      %s447 = sadd.s32 %s446, %s444
      %s448 = smul.addr %s447, 4
      %s449 = scalar_lea.vmem %s2, %s448
      %p450 = scmp.lt.s32.totalorder %s21, 1
      %s451 = scalar_select %p450, %s21, 1
      %p452 = scmp.lt.s32.totalorder %s22, 0
      %s453 = scalar_select %p452, %s22, 0
      %s454 = sadd.s32 %s453, %s451
      %s455 = smul.addr %s454, 4
      %s456 = scalar_lea.vmem %s3, %s455
      %p457 = scmp.lt.s32.totalorder %s21, 1
      %s458 = scalar_select %p457, %s21, 1
      %p459 = scmp.lt.s32.totalorder %s22, 0
      %s460 = scalar_select %p459, %s22, 0
      %s461 = sadd.s32 %s460, %s458
      %s462 = smul.addr %s461, 4
      %s463 = scalar_lea.vmem %s4, %s462
      // Predicated region
      $region33: #{dice_loss.1} parent=27 // pred_check
        %p464 = pneg %p115
      $region34: #{dice_loss.1} parent=27 // pred_check_branch
        %466 = sbr.rel (%p464) target = $region36
      $region35: #{dice_loss.1} parent=27 // pred_region
        _
      $region36: #{dice_loss.1} parent=27 // pred_fallthru
        _
      // Predicated region
      $region37: #{dice_loss.1} parent=27 // pred_check
        %p467 = pneg %p143
      $region38: #{dice_loss.1} parent=27 // pred_check_branch
        %469 = sbr.rel (%p467) target = $region40
      $region39: #{dice_loss.1} parent=27 // pred_region
        _
      $region40: #{dice_loss.1} parent=27 // pred_fallthru
        _
      // Predicated region
      $region41: #{dice_loss.1} parent=27 // pred_check
        %p470 = pneg %p171
      $region42: #{dice_loss.1} parent=27 // pred_check_branch
        %472 = sbr.rel (%p470) target = $region44
      $region43: #{dice_loss.1} parent=27 // pred_region
        _
      $region44: #{dice_loss.1} parent=27 // pred_fallthru
        _
    $region28: #{dice_loss.1} parent=5 // pred_fallthru
      _
    %p473 = scmp.le.s32.totalorder 2, %s11
    // Predicated region
    $region45: #{dice_loss.1} parent=5 // pred_check
      %p474 = pneg %p473
    $region46: #{dice_loss.1} parent=5 // pred_check_branch
      %476 = sbr.rel (%p474) target = $region48
    $region47: #{dice_loss.1} parent=5 // pred_region
      %s477 = ssub.s32 %s11, 2
      // Predicated region
      $region49: #{dice_loss.1} parent=47 // pred_check
        %p478 = pneg %p121
      $region50: #{dice_loss.1} parent=47 // pred_check_branch
        %480 = sbr.rel (%p478) target = $region52
      $region51: #{dice_loss.1} parent=47 // pred_region
        %p481 = scmp.lt.s32.totalorder %s24, 1
        %s482 = scalar_select %p481, %s24, 1
        %p483 = scmp.lt.s32.totalorder %s25, 0
        %s484 = scalar_select %p483, %s25, 0
        %s485 = sadd.s32 %s484, %s482
        %s486 = smul.addr %s485, 4
        %s487 = scalar_lea.vmem %s2, %s486
      $region52: #{dice_loss.1} parent=47 // pred_fallthru
        _
      // Predicated region
      $region53: #{dice_loss.1} parent=47 // pred_check
        %p488 = pneg %p149
      $region54: #{dice_loss.1} parent=47 // pred_check_branch
        %490 = sbr.rel (%p488) target = $region56
      $region55: #{dice_loss.1} parent=47 // pred_region
        %p491 = scmp.lt.s32.totalorder %s24, 1
        %s492 = scalar_select %p491, %s24, 1
        %p493 = scmp.lt.s32.totalorder %s25, 0
        %s494 = scalar_select %p493, %s25, 0
        %s495 = sadd.s32 %s494, %s492
        %s496 = smul.addr %s495, 4
        %s497 = scalar_lea.vmem %s3, %s496
      $region56: #{dice_loss.1} parent=47 // pred_fallthru
        _
      // Predicated region
      $region57: #{dice_loss.1} parent=47 // pred_check
        %p498 = pneg %p177
      $region58: #{dice_loss.1} parent=47 // pred_check_branch
        %500 = sbr.rel (%p498) target = $region60
      $region59: #{dice_loss.1} parent=47 // pred_region
        %p501 = scmp.lt.s32.totalorder %s24, 1
        %s502 = scalar_select %p501, %s24, 1
        %p503 = scmp.lt.s32.totalorder %s25, 0
        %s504 = scalar_select %p503, %s25, 0
        %s505 = sadd.s32 %s504, %s502
        %s506 = smul.addr %s505, 4
        %s507 = scalar_lea.vmem %s4, %s506
      $region60: #{dice_loss.1} parent=47 // pred_fallthru
        _
    $region48: #{dice_loss.1} parent=5 // pred_fallthru
      _
  $region6: #{dice_loss.1} parent=0 // loop_footer
    %s15 = sadd.s32 1, %s11
  $region7: #{dice_loss.1} parent=0 // loop_footer_branch
    %10 = sbr.rel target = $region3
  $region8: #{dice_loss.1} parent=0 // loop_exit
    _

</llo_original>
